<compile_context>
chip_gen: v5e
topology: v5e:2x2
jax: 0.10.0
libtpu: 0.0.40
codegen_flags: <defaults>
</compile_context>

<pallas_src>
import functools

import jax
import jax.numpy as jnp
import numpy as np
from jax.experimental import pallas as pl
from jax.experimental.pallas import tpu as pltpu

_BN_EPS = 1e-5


# ----------------------------- kernel helpers -----------------------------

def _lane_shift(x, off):
    """output[:, p] = x[:, p + off] when 0 <= p + off < M, else 0 (static shift, zero fill)."""
    if off == 0:
        return x
    z = jnp.zeros((x.shape[0], abs(off)), x.dtype)
    if off > 0:
        return jnp.concatenate([x[:, off:], z], axis=1)
    return jnp.concatenate([z, x[:, :off]], axis=1)


def _residual_fold(x, sc_s, sc_t, planes):
    """SRConv residual path (stride=1): channel zero-pad / group-fold + bnsc affine.

    x: (in_planes, M); sc_s / sc_t: (planes, 1).  All channel arithmetic lives on the
    sublane axis, so slices / concats are sublane-local (no cross-lane shuffles).
    """
    in_planes, M = x.shape
    if in_planes == planes:
        return x  # scbn=False, stride=1 -> identity residual, module has no bnsc
    if in_planes < planes:
        res = jnp.concatenate(
            [x, jnp.zeros((planes - in_planes, M), x.dtype)], axis=0)
    else:
        pad = planes - in_planes % planes
        if pad != planes:
            x = jnp.concatenate([x, jnp.zeros((pad, M), x.dtype)], axis=0)
        groups = x.shape[0] // planes
        res = x[0:planes, :]
        for g in range(1, groups):
            res = res + x[g * planes:(g + 1) * planes, :]
    return res * sc_s + sc_t


# ----------------------------- fused Pallas kernel -----------------------------

def _dense_layer_kernel(x_ref, mask_ref, w1_ref, w2_ref, bias2_ref, par_ref,
                        out_ref, res_ref, tap_ref, *, W):
    x = x_ref[...]                                   # (cin, BM)  f32 slab
    c1 = w1_ref.shape[0]
    c2 = w2_ref.shape[0]

    pr = par_ref[...]                                # packed tiny per-channel params
    b1 = pr[0:c1, 0:1]
    r1s, r1t = pr[0:c1, 1:2], pr[0:c1, 2:3]
    r2s, r2t = pr[0:c2, 3:4], pr[0:c2, 4:5]

    # ---------------- SRConv 1 : 1x1, scbn=False (BN1 folded into w1 / b1) ----------------
    out1 = jnp.dot(w1_ref[...], x.astype(w1_ref.dtype),
                   preferred_element_type=jnp.float32)
    out1 = jnp.maximum(out1 + b1, 0.0)               # folded conv bias + ReLU
    res1 = _residual_fold(x, r1s, r1t, c1)

    # ---------------- SRConv 2 : 3x3 pad=1, scbn=False ----------------
    x2 = out1 + res1                                 # fused list-add ([out, res] input), f32
    x2m = x2.astype(tap_ref.dtype)

    # Build the stacked im2col tap matrix in VMEM: rows [t*c1:(t+1)*c1] = masked tap t.
    # Static zero-filled lane shifts + the per-tap validity mask reproduce 'same' zero padding
    # (and also kill cross-image bleed when several images share the lane axis).
    for kh in range(3):
        for kw in range(3):
            t = kh * 3 + kw
            off = (kh - 1) * W + (kw - 1)
            tap_ref[t * c1:(t + 1) * c1, :] = (
                _lane_shift(x2m, off) * mask_ref[t]).astype(tap_ref.dtype)

    # One MXU matmul with K = 9*c1 (BN2 scale already folded into w2 in the wrapper).
    out2 = jnp.dot(w2_ref[...], tap_ref[...], preferred_element_type=jnp.float32)
    # bias plane = conv bias + border-exact BN2-shift contribution; then ReLU.
    out2 = jnp.maximum(out2 + bias2_ref[...], 0.0)
    res2 = _residual_fold(x2, r2s, r2t, c2)

    out_ref[...] = out2.astype(out_ref.dtype)
    res_ref[...] = res2.astype(res_ref.dtype)


# ----------------------------- wrapper -----------------------------

def _tap_masks(H, W):
    """Per-tap validity masks (constant, shape (9, H*W)) for the 3x3 'same' conv."""
    M = H * W
    hh, ww = np.divmod(np.arange(M), W)
    masks = []
    for kh in range(3):
        for kw in range(3):
            dh, dw = kh - 1, kw - 1
            masks.append((hh + dh >= 0) & (hh + dh < H) &
                         (ww + dw >= 0) & (ww + dw < W))
    return jnp.asarray(np.stack(masks).astype(np.float32))   # (9, M)


def dense_layer_forward(x_nchw, params, *, num_input_features, bn_size, growth_rate,
                        imgs_per_step=None, use_bf16_matmul=False):
    N, Cin, H, W = x_nchw.shape
    assert Cin == num_input_features
    M, c1, c2 = H * W, bn_size, growth_rate

    # Images per grid step: amortize per-step overhead / DMA setup over a wider lane-dense
    # slab, but keep >=2 grid steps when N allows so "parallel" still shards across the two
    # TensorCores on v7x megacore.
    if imgs_per_step is None:
        imgs_per_step = max(1, N // 2)
        while imgs_per_step > 1 and imgs_per_step * M * 4 > (1 << 20):
            imgs_per_step -= 1                       # keep the per-step slab VMEM-friendly
        while N % imgs_per_step:
            imgs_per_step -= 1
    B = imgs_per_step
    assert N % B == 0
    BM, G = B * M, N // B

    mm_dtype = jnp.bfloat16 if use_bf16_matmul else jnp.float32
    f32 = lambda v: jnp.asarray(v, jnp.float32)

    # (C, batch*spatial) slab layout: channels on sublanes, lanes stay dense.
    x2d = f32(x_nchw).reshape(N, Cin, M).transpose(1, 0, 2).reshape(Cin, N * M)

    p1, p2 = params["conv1"], params["conv2"]
    s1, t1 = f32(p1["bn_s"]), f32(p1["bn_t"])
    s2, t2 = f32(p2["bn_s"]), f32(p2["bn_t"])

    # --- fold BN1 into the 1x1 conv (exact): conv(bn(x)) == (w*s) @ x + (b + w @ t) ---
    w1 = f32(p1["w"][:, :, 0, 0])                           # (c1, Cin)
    w1f = w1 * s1[None, :]
    b1f = f32(p1["b"]) + w1 @ t1                            # (c1,)

    # --- fold BN2 scale into the 3x3 conv weights; BN2 shift into a per-position bias plane ---
    w2 = jnp.transpose(f32(p2["w"]), (2, 3, 0, 1)).reshape(9, c2, c1)   # (tap, Cout, Cin)
    w2f = w2 * s2[None, None, :]
    w2_flat = jnp.transpose(w2f, (1, 0, 2)).reshape(c2, 9 * c1)         # matches tap-row order

    tapmask = _tap_masks(H, W)                              # (9, M)
    # Per-position BN2-shift contribution: sum over *valid* taps of w2[t] @ t2 (+ conv bias).
    # (Folding t2 into a scalar bias would be wrong at the 'same'-padding borders.)
    vt = jnp.einsum("toc,c->to", w2, t2)                    # (9, c2)
    bias2_img = f32(p2["b"])[:, None] + jnp.einsum("to,tm->om", vt, tapmask)   # (c2, M)
    bias2 = jnp.tile(bias2_img, (1, B))                     # (c2, BM)
    mask = jnp.tile(tapmask.reshape(9, 1, M), (1, 1, B))    # (9, 1, BM)

    # bnsc params for the residual paths (identity affine when the module has no bnsc).
    def bnsc(p, in_planes, planes):
        if in_planes == planes:
            return jnp.ones((planes,), jnp.float32), jnp.zeros((planes,), jnp.float32)
        return f32(p["sc_s"]), f32(p["sc_t"])

    r1s, r1t = bnsc(p1, Cin, c1)
    r2s, r2t = bnsc(p2, c1, c2)

    # Pack all tiny per-channel vectors into ONE input (one DMA instead of ~7 sub-KB DMAs).
    cmax = max(c1, c2)
    colpad = lambda v: jnp.pad(v, (0, cmax - v.shape[0]))[:, None]
    packed = jnp.concatenate(
        [colpad(b1f), colpad(r1s), colpad(r1t), colpad(r2s), colpad(r2t)], axis=1)  # (cmax, 5)

    kernel = functools.partial(_dense_layer_kernel, W=W)

    def full(shape):
        nd = len(shape)
        return pl.BlockSpec(shape, lambda g: (0,) * nd)

    slab = lambda c: pl.BlockSpec((c, BM), lambda g: (0, g))

    out2d, res2d = pl.pallas_call(
        kernel,
        out_shape=(jax.ShapeDtypeStruct((c2, N * M), x_nchw.dtype),
                   jax.ShapeDtypeStruct((c2, N * M), x_nchw.dtype)),
        grid=(G,),
        in_specs=[slab(Cin),                 # x slab (only per-step-varying input)
                  full((9, 1, BM)),          # tap validity masks
                  full((c1, Cin)),           # w1 (BN1 folded)
                  full((c2, 9 * c1)),        # w2 stacked (BN2 scale folded)
                  full((c2, BM)),            # bias plane (b2 + border-exact BN2 shift)
                  full((cmax, 5))],          # packed tiny per-channel params
        out_specs=(slab(c2), slab(c2)),
        scratch_shapes=[pltpu.VMEM((9 * c1, BM), mm_dtype)],   # stacked im2col tap matrix
        compiler_params=pltpu.CompilerParams(
            dimension_semantics=("parallel",)),   # batch chunks shard across TCs on v7x
    )(x2d, mask, w1f.astype(mm_dtype), w2_flat.astype(mm_dtype), bias2, packed)

    def unslab(a):
        return a.reshape(c2, N, H, W).transpose(1, 0, 2, 3)

    return [unslab(out2d), unslab(res2d)]


# ----------------------------- parameter init -----------------------------

def init_bn(key, c):
    k1, k2, k3, k4 = jax.random.split(key, 4)
    gamma = jax.random.uniform(k1, (c,), minval=0.5, maxval=1.5)
    beta = jax.random.normal(k2, (c,)) * 0.1
    rm = jax.random.normal(k3, (c,)) * 0.1
    rv = jax.random.uniform(k4, (c,), minval=0.5, maxval=1.5)
    scale = gamma / jnp.sqrt(rv + _BN_EPS)
    shift = beta - rm * scale
    return scale.astype(jnp.float32), shift.astype(jnp.float32)


def init_srconv(key, in_planes, planes, kernel_size):
    # nn.Conv2d in SRConv uses default bias=True (the `bias` arg is never forwarded).
    kw, kb, kbn, kbnsc = jax.random.split(key, 4)
    fan_in = in_planes * kernel_size * kernel_size
    w = jax.random.normal(kw, (planes, in_planes, kernel_size, kernel_size)) / np.sqrt(fan_in)
    b = jax.random.normal(kb, (planes,)) * 0.05
    bn_s, bn_t = init_bn(kbn, in_planes)
    p = {"w": w.astype(jnp.float32), "b": b.astype(jnp.float32), "bn_s": bn_s, "bn_t": bn_t}
    if in_planes != planes:  # scbn=False, stride=1 in _DenseLayer -> bnsc only if planes differ
        sc_s, sc_t = init_bn(kbnsc, planes)
        p["sc_s"], p["sc_t"] = sc_s, sc_t
    return p


# ----------------------------- pure-JAX reference (for checking) -----------------------------

def _srconv_ref(x, p, *, in_planes, planes, kernel_size, padding):
    if isinstance(x, (list, tuple)):
        x = x[0] + x[1]

    def bn(t, s, sh):
        return t * s[None, :, None, None] + sh[None, :, None, None]

    xn = bn(x, p["bn_s"], p["bn_t"])
    out = jax.lax.conv_general_dilated(
        xn, p["w"], window_strides=(1, 1),
        padding=[(padding, padding), (padding, padding)],
        dimension_numbers=("NCHW", "OIHW", "NCHW"))
    out = jnp.maximum(out + p["b"][None, :, None, None], 0.0)

    res = x
    if in_planes < planes:
        res = jnp.pad(res, ((0, 0), (0, planes - in_planes), (0, 0), (0, 0)))
        res = bn(res, p["sc_s"], p["sc_t"])
    elif in_planes > planes:
        pad = planes - in_planes % planes
        if pad != planes:
            res = jnp.pad(res, ((0, 0), (0, pad), (0, 0), (0, 0)))
        Cp = res.shape[1]
        res = res.reshape(res.shape[0], Cp // planes, planes, res.shape[2], res.shape[3]).sum(axis=1)
        res = bn(res, p["sc_s"], p["sc_t"])
    return [out, res]


def _dense_layer_ref(x, params, *, num_input_features, bn_size, growth_rate):
    y = _srconv_ref(x, params["conv1"], in_planes=num_input_features, planes=bn_size,
                    kernel_size=1, padding=0)
    y = _srconv_ref(y, params["conv2"], in_planes=bn_size, planes=growth_rate,
                    kernel_size=3, padding=1)
    return y


# ----------------------------- main -----------------------------

if __name__ == "__main__":
    num_input_features, growth_rate, bn_size = 8, 8, 16
    N, H, W = 2, 16, 16

    key = jax.random.PRNGKey(0)
    kx, k1, k2 = jax.random.split(key, 3)

    x = jax.random.normal(kx, (N, num_input_features, H, W), dtype=jnp.float32)
    params = {
        "conv1": init_srconv(k1, num_input_features, bn_size, 1),
        "conv2": init_srconv(k2, bn_size, growth_rate, 3),
    }

    out_list = dense_layer_forward(
        x, params,
        num_input_features=num_input_features, bn_size=bn_size, growth_rate=growth_rate)
    out_list = [jax.block_until_ready(t) for t in out_list]

    ref_list = _dense_layer_ref(
        x, params,
        num_input_features=num_input_features, bn_size=bn_size, growth_rate=growth_rate)
    ref_list = [jax.block_until_ready(t) for t in ref_list]

    for got, ref in zip(out_list, ref_list):
        assert got.shape == ref.shape and got.dtype == ref.dtype
        np.testing.assert_allclose(np.asarray(got), np.asarray(ref), rtol=2e-3, atol=2e-3)

    print("KERNEL_OK")
</pallas_src>

<mosaic_0001>
module attributes {stable_mosaic.version = 11 : i64} {
  func.func @_dense_layer_kernel(%arg0: i32, %arg1: memref<8x256xf32, #tpu.memory_space<vmem>>, %arg2: memref<9x1x256xf32, #tpu.memory_space<vmem>>, %arg3: memref<16x8xf32, #tpu.memory_space<vmem>>, %arg4: memref<8x144xf32, #tpu.memory_space<vmem>>, %arg5: memref<8x256xf32, #tpu.memory_space<vmem>>, %arg6: memref<16x5xf32, #tpu.memory_space<vmem>>, %arg7: memref<8x256xf32, #tpu.memory_space<vmem>>, %arg8: memref<8x256xf32, #tpu.memory_space<vmem>>, %arg9: memref<144x256xf32, #tpu.memory_space<vmem>>) attributes {dimension_semantics = [#tpu.dimension_semantics<parallel>], iteration_bounds = array<i64: 2>, scalar_prefetch = 0 : i64, scratch_operands = 1 : i64, tpu.core_type = #tpu.core_type<tc>, window_params = [{transform_indices = @transform_0, window_bounds = array<i64: 8, 256>}, {pipeline_mode = #tpu.pipeline_mode<synchronous>, transform_indices = @transform_1, window_bounds = array<i64: 9, 1, 256>}, {pipeline_mode = #tpu.pipeline_mode<synchronous>, transform_indices = @transform_2, window_bounds = array<i64: 16, 8>}, {pipeline_mode = #tpu.pipeline_mode<synchronous>, transform_indices = @transform_3, window_bounds = array<i64: 8, 144>}, {pipeline_mode = #tpu.pipeline_mode<synchronous>, transform_indices = @transform_4, window_bounds = array<i64: 8, 256>}, {pipeline_mode = #tpu.pipeline_mode<synchronous>, transform_indices = @transform_5, window_bounds = array<i64: 16, 5>}, {transform_indices = @transform_6, window_bounds = array<i64: 8, 256>}, {transform_indices = @transform_7, window_bounds = array<i64: 8, 256>}]} {
    %c0 = arith.constant 0 : index
    %c0_0 = arith.constant 0 : index
    %0 = vector.load %arg1[%c0, %c0_0] : memref<8x256xf32, #tpu.memory_space<vmem>>, vector<8x256xf32>
    %c0_1 = arith.constant 0 : index
    %c0_2 = arith.constant 0 : index
    %1 = vector.load %arg6[%c0_1, %c0_2] : memref<16x5xf32, #tpu.memory_space<vmem>>, vector<16x5xf32>
    %2 = vector.extract_strided_slice %1 {offsets = [0, 0], sizes = [16, 1], strides = [1, 1]} : vector<16x5xf32> to vector<16x1xf32>
    %3 = vector.extract_strided_slice %1 {offsets = [0, 1], sizes = [16, 1], strides = [1, 1]} : vector<16x5xf32> to vector<16x1xf32>
    %4 = vector.extract_strided_slice %1 {offsets = [0, 2], sizes = [16, 1], strides = [1, 1]} : vector<16x5xf32> to vector<16x1xf32>
    %5 = vector.extract_strided_slice %1 {offsets = [0, 3], sizes = [8, 1], strides = [1, 1]} : vector<16x5xf32> to vector<8x1xf32>
    %6 = vector.extract_strided_slice %1 {offsets = [0, 4], sizes = [8, 1], strides = [1, 1]} : vector<16x5xf32> to vector<8x1xf32>
    %c0_3 = arith.constant 0 : index
    %c0_4 = arith.constant 0 : index
    %7 = vector.load %arg3[%c0_3, %c0_4] : memref<16x8xf32, #tpu.memory_space<vmem>>, vector<16x8xf32>
    %cst = arith.constant dense<0.000000e+00> : vector<16x256xf32>
    %8 = tpu.matmul %7, %0, %cst {dimension_numbers = #tpu.dot_dimension_numbers<[1], [0], [0], [1], [0, 0, 1, 1], [], []>} : vector<16x8xf32>, vector<8x256xf32>, vector<16x256xf32> -> vector<16x256xf32>
    %9 = vector.broadcast %2 : vector<16x1xf32> to vector<16x256xf32>
    %10 = arith.addf %8, %9 : vector<16x256xf32>
    %cst_5 = arith.constant 0.000000e+00 : f32
    %11 = vector.broadcast %cst_5 : f32 to vector<16x256xf32>
    %12 = arith.maximumf %10, %11 : vector<16x256xf32>
    %cst_6 = arith.constant 0.000000e+00 : f32
    %13 = vector.broadcast %cst_6 : f32 to vector<8x256xf32>
    %14 = tpu.concatenate %0, %13 in 0 : vector<8x256xf32>, vector<8x256xf32> -> vector<16x256xf32>
    %15 = vector.broadcast %3 : vector<16x1xf32> to vector<16x256xf32>
    %16 = arith.mulf %14, %15 : vector<16x256xf32>
    %17 = vector.broadcast %4 : vector<16x1xf32> to vector<16x256xf32>
    %18 = arith.addf %16, %17 : vector<16x256xf32>
    %19 = arith.addf %12, %18 : vector<16x256xf32>
    %cst_7 = arith.constant 0.000000e+00 : f32
    %20 = vector.broadcast %cst_7 : f32 to vector<16x17xf32>
    %21 = vector.extract_strided_slice %19 {offsets = [0, 0], sizes = [16, 239], strides = [1, 1]} : vector<16x256xf32> to vector<16x239xf32>
    %22 = tpu.concatenate %20, %21 in 1 : vector<16x17xf32>, vector<16x239xf32> -> vector<16x256xf32>
    %c0_8 = arith.constant 0 : index
    %c0_9 = arith.constant 0 : index
    %c0_10 = arith.constant 0 : index
    %23 = vector.load %arg2[%c0_8, %c0_9, %c0_10] : memref<9x1x256xf32, #tpu.memory_space<vmem>>, vector<1x1x256xf32>
    %24 = vector.shape_cast %23 : vector<1x1x256xf32> to vector<1x256xf32>
    %25 = vector.broadcast %24 : vector<1x256xf32> to vector<16x256xf32>
    %26 = arith.mulf %22, %25 : vector<16x256xf32>
    %c0_11 = arith.constant 0 : index
    %c0_12 = arith.constant 0 : index
    %27 = vector.load %arg9[%c0_11, %c0_12] : memref<144x256xf32, #tpu.memory_space<vmem>>, vector<16x256xf32>
    tpu.vector_store %arg9[%c0_11, %c0_12], %26 {strides = array<i32>} : memref<144x256xf32, #tpu.memory_space<vmem>>, vector<16x256xf32>,
    %cst_13 = arith.constant 0.000000e+00 : f32
    %28 = vector.broadcast %cst_13 : f32 to vector<16x16xf32>
    %29 = vector.extract_strided_slice %19 {offsets = [0, 0], sizes = [16, 240], strides = [1, 1]} : vector<16x256xf32> to vector<16x240xf32>
    %30 = tpu.concatenate %28, %29 in 1 : vector<16x16xf32>, vector<16x240xf32> -> vector<16x256xf32>
    %c1 = arith.constant 1 : index
    %c0_14 = arith.constant 0 : index
    %c0_15 = arith.constant 0 : index
    %31 = vector.load %arg2[%c1, %c0_14, %c0_15] : memref<9x1x256xf32, #tpu.memory_space<vmem>>, vector<1x1x256xf32>
    %32 = vector.shape_cast %31 : vector<1x1x256xf32> to vector<1x256xf32>
    %33 = vector.broadcast %32 : vector<1x256xf32> to vector<16x256xf32>
    %34 = arith.mulf %30, %33 : vector<16x256xf32>
    %c16 = arith.constant 16 : index
    %c0_16 = arith.constant 0 : index
    %35 = vector.load %arg9[%c16, %c0_16] : memref<144x256xf32, #tpu.memory_space<vmem>>, vector<16x256xf32>
    tpu.vector_store %arg9[%c16, %c0_16], %34 {strides = array<i32>} : memref<144x256xf32, #tpu.memory_space<vmem>>, vector<16x256xf32>,
    %cst_17 = arith.constant 0.000000e+00 : f32
    %36 = vector.broadcast %cst_17 : f32 to vector<16x15xf32>
    %37 = vector.extract_strided_slice %19 {offsets = [0, 0], sizes = [16, 241], strides = [1, 1]} : vector<16x256xf32> to vector<16x241xf32>
    %38 = tpu.concatenate %36, %37 in 1 : vector<16x15xf32>, vector<16x241xf32> -> vector<16x256xf32>
    %c2 = arith.constant 2 : index
    %c0_18 = arith.constant 0 : index
    %c0_19 = arith.constant 0 : index
    %39 = vector.load %arg2[%c2, %c0_18, %c0_19] : memref<9x1x256xf32, #tpu.memory_space<vmem>>, vector<1x1x256xf32>
    %40 = vector.shape_cast %39 : vector<1x1x256xf32> to vector<1x256xf32>
    %41 = vector.broadcast %40 : vector<1x256xf32> to vector<16x256xf32>
    %42 = arith.mulf %38, %41 : vector<16x256xf32>
    %c32 = arith.constant 32 : index
    %c0_20 = arith.constant 0 : index
    %43 = vector.load %arg9[%c32, %c0_20] : memref<144x256xf32, #tpu.memory_space<vmem>>, vector<16x256xf32>
    tpu.vector_store %arg9[%c32, %c0_20], %42 {strides = array<i32>} : memref<144x256xf32, #tpu.memory_space<vmem>>, vector<16x256xf32>,
    %cst_21 = arith.constant 0.000000e+00 : f32
    %44 = vector.broadcast %cst_21 : f32 to vector<16x1xf32>
    %45 = vector.extract_strided_slice %19 {offsets = [0, 0], sizes = [16, 255], strides = [1, 1]} : vector<16x256xf32> to vector<16x255xf32>
    %46 = tpu.concatenate %44, %45 in 1 : vector<16x1xf32>, vector<16x255xf32> -> vector<16x256xf32>
    %c3 = arith.constant 3 : index
    %c0_22 = arith.constant 0 : index
    %c0_23 = arith.constant 0 : index
    %47 = vector.load %arg2[%c3, %c0_22, %c0_23] : memref<9x1x256xf32, #tpu.memory_space<vmem>>, vector<1x1x256xf32>
    %48 = vector.shape_cast %47 : vector<1x1x256xf32> to vector<1x256xf32>
    %49 = vector.broadcast %48 : vector<1x256xf32> to vector<16x256xf32>
    %50 = arith.mulf %46, %49 : vector<16x256xf32>
    %c48 = arith.constant 48 : index
    %c0_24 = arith.constant 0 : index
    %51 = vector.load %arg9[%c48, %c0_24] : memref<144x256xf32, #tpu.memory_space<vmem>>, vector<16x256xf32>
    tpu.vector_store %arg9[%c48, %c0_24], %50 {strides = array<i32>} : memref<144x256xf32, #tpu.memory_space<vmem>>, vector<16x256xf32>,
    %c4 = arith.constant 4 : index
    %c0_25 = arith.constant 0 : index
    %c0_26 = arith.constant 0 : index
    %52 = vector.load %arg2[%c4, %c0_25, %c0_26] : memref<9x1x256xf32, #tpu.memory_space<vmem>>, vector<1x1x256xf32>
    %53 = vector.shape_cast %52 : vector<1x1x256xf32> to vector<1x256xf32>
    %54 = vector.broadcast %53 : vector<1x256xf32> to vector<16x256xf32>
    %55 = arith.mulf %19, %54 : vector<16x256xf32>
    %c64 = arith.constant 64 : index
    %c0_27 = arith.constant 0 : index
    %56 = vector.load %arg9[%c64, %c0_27] : memref<144x256xf32, #tpu.memory_space<vmem>>, vector<16x256xf32>
    tpu.vector_store %arg9[%c64, %c0_27], %55 {strides = array<i32>} : memref<144x256xf32, #tpu.memory_space<vmem>>, vector<16x256xf32>,
    %cst_28 = arith.constant 0.000000e+00 : f32
    %57 = vector.broadcast %cst_28 : f32 to vector<16x1xf32>
    %58 = vector.extract_strided_slice %19 {offsets = [0, 1], sizes = [16, 255], strides = [1, 1]} : vector<16x256xf32> to vector<16x255xf32>
    %59 = tpu.concatenate %58, %57 in 1 : vector<16x255xf32>, vector<16x1xf32> -> vector<16x256xf32>
    %c5 = arith.constant 5 : index
    %c0_29 = arith.constant 0 : index
    %c0_30 = arith.constant 0 : index
    %60 = vector.load %arg2[%c5, %c0_29, %c0_30] : memref<9x1x256xf32, #tpu.memory_space<vmem>>, vector<1x1x256xf32>
    %61 = vector.shape_cast %60 : vector<1x1x256xf32> to vector<1x256xf32>
    %62 = vector.broadcast %61 : vector<1x256xf32> to vector<16x256xf32>
    %63 = arith.mulf %59, %62 : vector<16x256xf32>
    %c80 = arith.constant 80 : index
    %c0_31 = arith.constant 0 : index
    %64 = vector.load %arg9[%c80, %c0_31] : memref<144x256xf32, #tpu.memory_space<vmem>>, vector<16x256xf32>
    tpu.vector_store %arg9[%c80, %c0_31], %63 {strides = array<i32>} : memref<144x256xf32, #tpu.memory_space<vmem>>, vector<16x256xf32>,
    %cst_32 = arith.constant 0.000000e+00 : f32
    %65 = vector.broadcast %cst_32 : f32 to vector<16x15xf32>
    %66 = vector.extract_strided_slice %19 {offsets = [0, 15], sizes = [16, 241], strides = [1, 1]} : vector<16x256xf32> to vector<16x241xf32>
    %67 = tpu.concatenate %66, %65 in 1 : vector<16x241xf32>, vector<16x15xf32> -> vector<16x256xf32>
    %c6 = arith.constant 6 : index
    %c0_33 = arith.constant 0 : index
    %c0_34 = arith.constant 0 : index
    %68 = vector.load %arg2[%c6, %c0_33, %c0_34] : memref<9x1x256xf32, #tpu.memory_space<vmem>>, vector<1x1x256xf32>
    %69 = vector.shape_cast %68 : vector<1x1x256xf32> to vector<1x256xf32>
    %70 = vector.broadcast %69 : vector<1x256xf32> to vector<16x256xf32>
    %71 = arith.mulf %67, %70 : vector<16x256xf32>
    %c96 = arith.constant 96 : index
    %c0_35 = arith.constant 0 : index
    %72 = vector.load %arg9[%c96, %c0_35] : memref<144x256xf32, #tpu.memory_space<vmem>>, vector<16x256xf32>
    tpu.vector_store %arg9[%c96, %c0_35], %71 {strides = array<i32>} : memref<144x256xf32, #tpu.memory_space<vmem>>, vector<16x256xf32>,
    %cst_36 = arith.constant 0.000000e+00 : f32
    %73 = vector.broadcast %cst_36 : f32 to vector<16x16xf32>
    %74 = vector.extract_strided_slice %19 {offsets = [0, 16], sizes = [16, 240], strides = [1, 1]} : vector<16x256xf32> to vector<16x240xf32>
    %75 = tpu.concatenate %74, %73 in 1 : vector<16x240xf32>, vector<16x16xf32> -> vector<16x256xf32>
    %c7 = arith.constant 7 : index
    %c0_37 = arith.constant 0 : index
    %c0_38 = arith.constant 0 : index
    %76 = vector.load %arg2[%c7, %c0_37, %c0_38] : memref<9x1x256xf32, #tpu.memory_space<vmem>>, vector<1x1x256xf32>
    %77 = vector.shape_cast %76 : vector<1x1x256xf32> to vector<1x256xf32>
    %78 = vector.broadcast %77 : vector<1x256xf32> to vector<16x256xf32>
    %79 = arith.mulf %75, %78 : vector<16x256xf32>
    %c112 = arith.constant 112 : index
    %c0_39 = arith.constant 0 : index
    %80 = vector.load %arg9[%c112, %c0_39] : memref<144x256xf32, #tpu.memory_space<vmem>>, vector<16x256xf32>
    tpu.vector_store %arg9[%c112, %c0_39], %79 {strides = array<i32>} : memref<144x256xf32, #tpu.memory_space<vmem>>, vector<16x256xf32>,
    %cst_40 = arith.constant 0.000000e+00 : f32
    %81 = vector.broadcast %cst_40 : f32 to vector<16x17xf32>
    %82 = vector.extract_strided_slice %19 {offsets = [0, 17], sizes = [16, 239], strides = [1, 1]} : vector<16x256xf32> to vector<16x239xf32>
    %83 = tpu.concatenate %82, %81 in 1 : vector<16x239xf32>, vector<16x17xf32> -> vector<16x256xf32>
    %c8 = arith.constant 8 : index
    %c0_41 = arith.constant 0 : index
    %c0_42 = arith.constant 0 : index
    %84 = vector.load %arg2[%c8, %c0_41, %c0_42] : memref<9x1x256xf32, #tpu.memory_space<vmem>>, vector<1x1x256xf32>
    %85 = vector.shape_cast %84 : vector<1x1x256xf32> to vector<1x256xf32>
    %86 = vector.broadcast %85 : vector<1x256xf32> to vector<16x256xf32>
    %87 = arith.mulf %83, %86 : vector<16x256xf32>
    %c128 = arith.constant 128 : index
    %c0_43 = arith.constant 0 : index
    %88 = vector.load %arg9[%c128, %c0_43] : memref<144x256xf32, #tpu.memory_space<vmem>>, vector<16x256xf32>
    tpu.vector_store %arg9[%c128, %c0_43], %87 {strides = array<i32>} : memref<144x256xf32, #tpu.memory_space<vmem>>, vector<16x256xf32>,
    %c0_44 = arith.constant 0 : index
    %c0_45 = arith.constant 0 : index
    %89 = vector.load %arg4[%c0_44, %c0_45] : memref<8x144xf32, #tpu.memory_space<vmem>>, vector<8x144xf32>
    %c0_46 = arith.constant 0 : index
    %c0_47 = arith.constant 0 : index
    %90 = vector.load %arg9[%c0_46, %c0_47] : memref<144x256xf32, #tpu.memory_space<vmem>>, vector<144x256xf32>
    %cst_48 = arith.constant dense<0.000000e+00> : vector<8x256xf32>
    %91 = tpu.matmul %89, %90, %cst_48 {dimension_numbers = #tpu.dot_dimension_numbers<[1], [0], [0], [1], [0, 0, 1, 1], [], []>} : vector<8x144xf32>, vector<144x256xf32>, vector<8x256xf32> -> vector<8x256xf32>
    %c0_49 = arith.constant 0 : index
    %c0_50 = arith.constant 0 : index
    %92 = vector.load %arg5[%c0_49, %c0_50] : memref<8x256xf32, #tpu.memory_space<vmem>>, vector<8x256xf32>
    %93 = arith.addf %91, %92 : vector<8x256xf32>
    %cst_51 = arith.constant 0.000000e+00 : f32
    %94 = vector.broadcast %cst_51 : f32 to vector<8x256xf32>
    %95 = arith.maximumf %93, %94 : vector<8x256xf32>
    %96 = vector.extract_strided_slice %19 {offsets = [0, 0], sizes = [8, 256], strides = [1, 1]} : vector<16x256xf32> to vector<8x256xf32>
    %97 = vector.extract_strided_slice %19 {offsets = [8, 0], sizes = [8, 256], strides = [1, 1]} : vector<16x256xf32> to vector<8x256xf32>
    %98 = arith.addf %96, %97 : vector<8x256xf32>
    %99 = vector.broadcast %5 : vector<8x1xf32> to vector<8x256xf32>
    %100 = arith.mulf %98, %99 : vector<8x256xf32>
    %101 = vector.broadcast %6 : vector<8x1xf32> to vector<8x256xf32>
    %102 = arith.addf %100, %101 : vector<8x256xf32>
    %c0_52 = arith.constant 0 : index
    %c0_53 = arith.constant 0 : index
    %103 = vector.load %arg7[%c0_52, %c0_53] : memref<8x256xf32, #tpu.memory_space<vmem>>, vector<8x256xf32>
    tpu.vector_store %arg7[%c0_52, %c0_53], %95 {strides = array<i32>} : memref<8x256xf32, #tpu.memory_space<vmem>>, vector<8x256xf32>,
    %c0_54 = arith.constant 0 : index
    %c0_55 = arith.constant 0 : index
    %104 = vector.load %arg8[%c0_54, %c0_55] : memref<8x256xf32, #tpu.memory_space<vmem>>, vector<8x256xf32>
    tpu.vector_store %arg8[%c0_54, %c0_55], %102 {strides = array<i32>} : memref<8x256xf32, #tpu.memory_space<vmem>>, vector<8x256xf32>,
    return
  }
  func.func @transform_0(%arg0: i32) -> (i32, i32) {
    %c0_i32 = arith.constant 0 : i32
    %c0_i32_0 = arith.constant 0 : i32
    return %c0_i32, %arg0 : i32, i32
  }
  func.func @transform_1(%arg0: i32) -> (i32, i32, i32) {
    %c0_i32 = arith.constant 0 : i32
    %c0_i32_0 = arith.constant 0 : i32
    %c0_i32_1 = arith.constant 0 : i32
    %c0_i32_2 = arith.constant 0 : i32
    return %c0_i32, %c0_i32_0, %c0_i32_1 : i32, i32, i32
  }
  func.func @transform_2(%arg0: i32) -> (i32, i32) {
    %c0_i32 = arith.constant 0 : i32
    %c0_i32_0 = arith.constant 0 : i32
    %c0_i32_1 = arith.constant 0 : i32
    return %c0_i32, %c0_i32_0 : i32, i32
  }
  func.func @transform_3(%arg0: i32) -> (i32, i32) {
    %c0_i32 = arith.constant 0 : i32
    %c0_i32_0 = arith.constant 0 : i32
    %c0_i32_1 = arith.constant 0 : i32
    return %c0_i32, %c0_i32_0 : i32, i32
  }
  func.func @transform_4(%arg0: i32) -> (i32, i32) {
    %c0_i32 = arith.constant 0 : i32
    %c0_i32_0 = arith.constant 0 : i32
    %c0_i32_1 = arith.constant 0 : i32
    return %c0_i32, %c0_i32_0 : i32, i32
  }
  func.func @transform_5(%arg0: i32) -> (i32, i32) {
    %c0_i32 = arith.constant 0 : i32
    %c0_i32_0 = arith.constant 0 : i32
    %c0_i32_1 = arith.constant 0 : i32
    return %c0_i32, %c0_i32_0 : i32, i32
  }
  func.func @transform_6(%arg0: i32) -> (i32, i32) {
    %c0_i32 = arith.constant 0 : i32
    %c0_i32_0 = arith.constant 0 : i32
    return %c0_i32, %arg0 : i32, i32
  }
  func.func @transform_7(%arg0: i32) -> (i32, i32) {
    %c0_i32 = arith.constant 0 : i32
    %c0_i32_0 = arith.constant 0 : i32
    return %c0_i32, %arg0 : i32, i32
  }
}

</mosaic_0001>

<llo_original>
// kernel: tpu_custom_call.1
$region0: #{tpu_custom_call.1}
  #allocation0 [shape = 'u32[]', space=smem, size = 0x4, offset = 0x4, fixed_abs, tag = 'smem constant byte address 0x4 - core index']
  #allocation1 [shape = 'u32[72,128]{1,0:T(1,128)}', space=vmem, size = 0x9000, scoped, tag = 'internal scratch']
  #allocation2 [shape = 'f32[144,256]{1,0:T(8,128)}', space=vmem, size = 0x24000, scoped, tag = 'scratch operand']
  %s0 = inlined_call_operand.vmem [shape: f32[8,512], index: 0, kind: input, shape index: {}]
  %s1 = inlined_call_operand.hbm [shape: f32[9,1,256], index: 1, kind: input, shape index: {}]
  %s2 = inlined_call_operand.vmem [shape: f32[16,8], index: 2, kind: input, shape index: {}]
  %s3 = inlined_call_operand.hbm [shape: f32[8,144], index: 3, kind: input, shape index: {}]
  %s4 = inlined_call_operand.hbm [shape: f32[8,256], index: 4, kind: input, shape index: {}]
  %s5 = inlined_call_operand.vmem [shape: f32[16,5], index: 5, kind: input, shape index: {}]
  %s6 = inlined_call_operand.hbm [shape: f32[8,512], index: 6, kind: output, shape index: {0}]
  %s7 = inlined_call_operand.hbm [shape: f32[8,512], index: 7, kind: output, shape index: {1}]
  %8 = xla_tuple %s6, %s7
  %s9 = sld [smem:[#allocation0]]
  $region77: #{tpu_custom_call.1} parent=0
    _
  %s11 = ssub.s32 1, %s9
  %s12 = scalar_select 0, %s11, %s9
  $region1: #{tpu_custom_call.1} parent=0
    #allocation3 [shape = 'u8[9216]{0}', space=vmem, size = 0x2400, scoped, tag = 'input window, operand 1, single buffered']
    #allocation4 [shape = 's32[2]{0}', space=sflag, size = 0x8, scoped, tag = 'scoped memory for tpu_custom_call.1']
    #allocation5 [shape = 's32[2]{0}', space=sflag, size = 0x8, scoped, tag = 'scoped memory for tpu_custom_call.1']
    #allocation6 [shape = 'u8[8192]{0}', space=vmem, size = 0x2000, scoped, tag = 'input window, operand 3, single buffered']
    #allocation7 [shape = 's32[1]{0}', space=sflag, size = 0x4, scoped, tag = 'scoped memory for tpu_custom_call.1']
    #allocation8 [shape = 'u8[8192]{0}', space=vmem, size = 0x2000, scoped, tag = 'input window, operand 4, single buffered']
    #allocation9 [shape = 'u8[16384]{0}', space=vmem, size = 0x4000, scoped, tag = 'output window, operand 0']
    #allocation10 [shape = 'u8[16384]{0}', space=vmem, size = 0x4000, scoped, tag = 'output window, operand 1']
    #allocation11 [shape = 's32[2]{0}', space=sflag, size = 0x8, scoped, tag = 'scoped memory for tpu_custom_call.1']
    %13 = vsyncpa [#allocation4], 0
    %14 = vsyncpa [#allocation7], 0
    %15 = vsyncpa [#allocation5], 0
    %s16 = scalar_lea.sflag [#allocation5], 1
    %17 = vsyncpa %s16, 0
    %18 = vsyncpa [#allocation11], 0
    %s19 = scalar_lea.sflag [#allocation11], 1
    %20 = vsyncpa %s19, 0
    loop: start=0, step=1, limit=4
    $region2: #{tpu_custom_call.1} parent=1 // loop_pre_header
      _
    $region3: #{tpu_custom_call.1} parent=1 // loop_header
      %s22 = sphi 0, %s26
      %p23 = scmp.ge.s32.totalorder %s22, 4
      %s32 = sphi 0, %s34
      %s35 = sphi 0, %s32
      %s36 = sphi 0, %s35
      %s52 = sphi 0, %s36
      %s56 = sphi 0, %s56
      %s58 = sphi 0, %s56
      %s59 = sphi 0, %s58
      %s73 = sphi 0, %s59
      %s77 = sphi 0, %s77
      %s79 = sphi 0, %s77
      %s80 = sphi 0, %s79
      %s94 = sphi 0, %s80
      %s98 = sphi 0, %s98
      %s100 = sphi 0, %s98
      %s101 = sphi 0, %s100
      %s115 = sphi 0, %s101
      %s119 = sphi 0, %s119
      %s121 = sphi 0, %s119
      %s122 = sphi 0, %s121
      %s136 = sphi 0, %s122
      %s140 = sphi 0, %s140
      %s142 = sphi 0, %s140
      %s143 = sphi 0, %s142
      %s157 = sphi 0, %s143
      %s163 = sphi 0, %s165
      %s166 = sphi 0, %s163
      %s167 = sphi 0, %s166
      %s183 = sphi 0, %s167
      %s189 = sphi 0, %s191
      %s192 = sphi 0, %s189
      %s193 = sphi 0, %s192
      %s209 = sphi 0, %s193
    $region4: #{tpu_custom_call.1} parent=1 // loop_header_branch
      %25 = sbr.rel (%p23) target = $region8
    $region5: #{tpu_custom_call.1} parent=1 // loop_body
      %s27 = ssub.s32 %s22, 1
      %s28 = ssub.s32 %s22, 2
      %s29 = sadd.s32 %s22, 1
      %s30 = ssub.s32 %s22, %s29
      %p31 = scmp.eq.s32.totalorder %s30, 0
      %s33 = sadd.s32 %s32, 1
      %s34 = scalar_select %p31, %s32, %s33
      %p37 = pneg %p31
      %p38 = scmp.eq.s32.totalorder %s22, 1
      %p39 = por %p37, %p38
      %p40 = scmp.ne.s32.totalorder %s32, %s35
      %p41 = scmp.eq.s32.totalorder %s22, 0
      %p42 = por %p40, %p41
      %p43 = scmp.ne.s32.totalorder %s32, %s35
      %p44 = scmp.eq.s32.totalorder %s27, 1
      %p45 = por %p43, %p44
      %p46 = scmp.ne.s32.totalorder %s35, %s36
      %p47 = scmp.eq.s32.totalorder %s27, 0
      %p48 = por %p46, %p47
      %p49 = scmp.ne.s32.totalorder %s35, %s36
      %p50 = scmp.eq.s32.totalorder %s28, 1
      %p51 = por %p49, %p50
      %p53 = scmp.ne.s32.totalorder %s36, %s52
      %p54 = scmp.eq.s32.totalorder %s28, 0
      %p55 = por %p53, %p54
      %s57 = sadd.s32 %s56, 1
      %p60 = scmp.eq.s32.totalorder %s22, 1
      %p61 = scmp.ne.s32.totalorder %s56, %s58
      %p62 = scmp.eq.s32.totalorder %s22, 0
      %p63 = por %p61, %p62
      %p64 = scmp.ne.s32.totalorder %s56, %s58
      %p65 = scmp.eq.s32.totalorder %s27, 1
      %p66 = por %p64, %p65
      %p67 = scmp.ne.s32.totalorder %s58, %s59
      %p68 = scmp.eq.s32.totalorder %s27, 0
      %p69 = por %p67, %p68
      %p70 = scmp.ne.s32.totalorder %s58, %s59
      %p71 = scmp.eq.s32.totalorder %s28, 1
      %p72 = por %p70, %p71
      %p74 = scmp.ne.s32.totalorder %s59, %s73
      %p75 = scmp.eq.s32.totalorder %s28, 0
      %p76 = por %p74, %p75
      %s78 = sadd.s32 %s77, 1
      %p81 = scmp.eq.s32.totalorder %s22, 1
      %p82 = scmp.ne.s32.totalorder %s77, %s79
      %p83 = scmp.eq.s32.totalorder %s22, 0
      %p84 = por %p82, %p83
      %p85 = scmp.ne.s32.totalorder %s77, %s79
      %p86 = scmp.eq.s32.totalorder %s27, 1
      %p87 = por %p85, %p86
      %p88 = scmp.ne.s32.totalorder %s79, %s80
      %p89 = scmp.eq.s32.totalorder %s27, 0
      %p90 = por %p88, %p89
      %p91 = scmp.ne.s32.totalorder %s79, %s80
      %p92 = scmp.eq.s32.totalorder %s28, 1
      %p93 = por %p91, %p92
      %p95 = scmp.ne.s32.totalorder %s80, %s94
      %p96 = scmp.eq.s32.totalorder %s28, 0
      %p97 = por %p95, %p96
      %s99 = sadd.s32 %s98, 1
      %p102 = scmp.eq.s32.totalorder %s22, 1
      %p103 = scmp.ne.s32.totalorder %s98, %s100
      %p104 = scmp.eq.s32.totalorder %s22, 0
      %p105 = por %p103, %p104
      %p106 = scmp.ne.s32.totalorder %s98, %s100
      %p107 = scmp.eq.s32.totalorder %s27, 1
      %p108 = por %p106, %p107
      %p109 = scmp.ne.s32.totalorder %s100, %s101
      %p110 = scmp.eq.s32.totalorder %s27, 0
      %p111 = por %p109, %p110
      %p112 = scmp.ne.s32.totalorder %s100, %s101
      %p113 = scmp.eq.s32.totalorder %s28, 1
      %p114 = por %p112, %p113
      %p116 = scmp.ne.s32.totalorder %s101, %s115
      %p117 = scmp.eq.s32.totalorder %s28, 0
      %p118 = por %p116, %p117
      %s120 = sadd.s32 %s119, 1
      %p123 = scmp.eq.s32.totalorder %s22, 1
      %p124 = scmp.ne.s32.totalorder %s119, %s121
      %p125 = scmp.eq.s32.totalorder %s22, 0
      %p126 = por %p124, %p125
      %p127 = scmp.ne.s32.totalorder %s119, %s121
      %p128 = scmp.eq.s32.totalorder %s27, 1
      %p129 = por %p127, %p128
      %p130 = scmp.ne.s32.totalorder %s121, %s122
      %p131 = scmp.eq.s32.totalorder %s27, 0
      %p132 = por %p130, %p131
      %p133 = scmp.ne.s32.totalorder %s121, %s122
      %p134 = scmp.eq.s32.totalorder %s28, 1
      %p135 = por %p133, %p134
      %p137 = scmp.ne.s32.totalorder %s122, %s136
      %p138 = scmp.eq.s32.totalorder %s28, 0
      %p139 = por %p137, %p138
      %s141 = sadd.s32 %s140, 1
      %p144 = scmp.eq.s32.totalorder %s22, 1
      %p145 = scmp.ne.s32.totalorder %s140, %s142
      %p146 = scmp.eq.s32.totalorder %s22, 0
      %p147 = por %p145, %p146
      %p148 = scmp.ne.s32.totalorder %s140, %s142
      %p149 = scmp.eq.s32.totalorder %s27, 1
      %p150 = por %p148, %p149
      %p151 = scmp.ne.s32.totalorder %s142, %s143
      %p152 = scmp.eq.s32.totalorder %s27, 0
      %p153 = por %p151, %p152
      %p154 = scmp.ne.s32.totalorder %s142, %s143
      %p155 = scmp.eq.s32.totalorder %s28, 1
      %p156 = por %p154, %p155
      %p158 = scmp.ne.s32.totalorder %s143, %s157
      %p159 = scmp.eq.s32.totalorder %s28, 0
      %p160 = por %p158, %p159
      %s161 = ssub.s32 %s22, %s29
      %p162 = scmp.eq.s32.totalorder %s161, 0
      %s164 = sadd.s32 %s163, 1
      %s165 = scalar_select %p162, %s163, %s164
      %p168 = pneg %p162
      %p169 = scmp.eq.s32.totalorder %s22, 1
      %p170 = por %p168, %p169
      %p171 = scmp.ne.s32.totalorder %s163, %s166
      %p172 = scmp.eq.s32.totalorder %s22, 0
      %p173 = por %p171, %p172
      %p174 = scmp.ne.s32.totalorder %s163, %s166
      %p175 = scmp.eq.s32.totalorder %s27, 1
      %p176 = por %p174, %p175
      %p177 = scmp.ne.s32.totalorder %s166, %s167
      %p178 = scmp.eq.s32.totalorder %s27, 0
      %p179 = por %p177, %p178
      %p180 = scmp.ne.s32.totalorder %s166, %s167
      %p181 = scmp.eq.s32.totalorder %s28, 1
      %p182 = por %p180, %p181
      %p184 = scmp.ne.s32.totalorder %s167, %s183
      %p185 = scmp.eq.s32.totalorder %s28, 0
      %p186 = por %p184, %p185
      %s187 = ssub.s32 %s22, %s29
      %p188 = scmp.eq.s32.totalorder %s187, 0
      %s190 = sadd.s32 %s189, 1
      %s191 = scalar_select %p188, %s189, %s190
      %p194 = pneg %p188
      %p195 = scmp.eq.s32.totalorder %s22, 1
      %p196 = por %p194, %p195
      %p197 = scmp.ne.s32.totalorder %s189, %s192
      %p198 = scmp.eq.s32.totalorder %s22, 0
      %p199 = por %p197, %p198
      %p200 = scmp.ne.s32.totalorder %s189, %s192
      %p201 = scmp.eq.s32.totalorder %s27, 1
      %p202 = por %p200, %p201
      %p203 = scmp.ne.s32.totalorder %s192, %s193
      %p204 = scmp.eq.s32.totalorder %s27, 0
      %p205 = por %p203, %p204
      %p206 = scmp.ne.s32.totalorder %s192, %s193
      %p207 = scmp.eq.s32.totalorder %s28, 1
      %p208 = por %p206, %p207
      %p210 = scmp.ne.s32.totalorder %s193, %s209
      %p211 = scmp.eq.s32.totalorder %s28, 0
      %p212 = por %p210, %p211
      %p213 = scmp.le.s32.totalorder 1, %s22
      %p214 = scmp.lt.s32.totalorder %s22, 3
      %p215 = pnand %p213, %p214
      %p216 = pneg %p215
      // Predicated region
      $region9: #{tpu_custom_call.1} parent=5 // pred_check
        _
      $region10: #{tpu_custom_call.1} parent=5 // pred_check_branch
        %218 = sbr.rel (%p215) target = $region12
      $region11: #{tpu_custom_call.1} parent=5 // pred_region
        %s219 = ssub.s32 %s22, 1
        // Predicated region
        $region13: #{tpu_custom_call.1} parent=11 // pred_check
          %p220 = pneg %p69
        $region14: #{tpu_custom_call.1} parent=11 // pred_check_branch
          %222 = sbr.rel (%p220) target = $region16
        $region15: #{tpu_custom_call.1} parent=11 // pred_region
          %224 = vsyncadd [#allocation4], 0
          %s225 = sshll.u32 %s1, 4
          %s226 = int_to_ptr.hbm [resolvable:$true] %s225
          %s227 = sshll.u32 [#allocation3], 4
          %s228 = int_to_ptr.vmem [resolvable:$true] %s227
          %233 = dma.hbm_to_vmem [thread:$0]  %s226, 288, %s228, [#allocation4], 32, 32, 2
        $region16: #{tpu_custom_call.1} parent=11 // pred_fallthru
          _
        // Predicated region
        $region17: #{tpu_custom_call.1} parent=11 // pred_check
          %p234 = pneg %p90
        $region18: #{tpu_custom_call.1} parent=11 // pred_check_branch
          %236 = sbr.rel (%p234) target = $region20
        $region19: #{tpu_custom_call.1} parent=11 // pred_region
          _
        $region20: #{tpu_custom_call.1} parent=11 // pred_fallthru
          _
        // Predicated region
        $region21: #{tpu_custom_call.1} parent=11 // pred_check
          %p237 = pneg %p111
        $region22: #{tpu_custom_call.1} parent=11 // pred_check_branch
          %239 = sbr.rel (%p237) target = $region24
        $region23: #{tpu_custom_call.1} parent=11 // pred_region
          %241 = vsyncadd [#allocation7], 0
          %s243 = sshll.u32 %s3, 4
          %s244 = int_to_ptr.hbm [resolvable:$true] %s243
          %s245 = sshll.u32 [#allocation6], 4
          %s246 = int_to_ptr.vmem [resolvable:$true] %s245
          %248 = dma.hbm_to_vmem [thread:$0]  %s244, 256, %s246, [#allocation7]
        $region24: #{tpu_custom_call.1} parent=11 // pred_fallthru
          _
        // Predicated region
        $region25: #{tpu_custom_call.1} parent=11 // pred_check
          %p249 = pneg %p132
        $region26: #{tpu_custom_call.1} parent=11 // pred_check_branch
          %251 = sbr.rel (%p249) target = $region28
        $region27: #{tpu_custom_call.1} parent=11 // pred_region
          %253 = vsyncadd [#allocation7], 0
          %s255 = sshll.u32 %s4, 4
          %s256 = int_to_ptr.hbm [resolvable:$true] %s255
          %s257 = sshll.u32 [#allocation8], 4
          %s258 = int_to_ptr.vmem [resolvable:$true] %s257
          %260 = dma.hbm_to_vmem [thread:$0]  %s256, 256, %s258, [#allocation7]
        $region28: #{tpu_custom_call.1} parent=11 // pred_fallthru
          _
        // Predicated region
        $region29: #{tpu_custom_call.1} parent=11 // pred_check
          %p261 = pneg %p153
        $region30: #{tpu_custom_call.1} parent=11 // pred_check_branch
          %263 = sbr.rel (%p261) target = $region32
        $region31: #{tpu_custom_call.1} parent=11 // pred_region
          _
        $region32: #{tpu_custom_call.1} parent=11 // pred_fallthru
          _
      $region12: #{tpu_custom_call.1} parent=5 // pred_fallthru
        _
      %p264 = scmp.lt.s32.totalorder %s22, 2
      // Predicated region
      $region33: #{tpu_custom_call.1} parent=5 // pred_check
        %p265 = pneg %p264
      $region34: #{tpu_custom_call.1} parent=5 // pred_check_branch
        %267 = sbr.rel (%p265) target = $region36
      $region35: #{tpu_custom_call.1} parent=5 // pred_region
        // Predicated region
        $region37: #{tpu_custom_call.1} parent=35 // pred_check
          %p268 = pneg %p42
        $region38: #{tpu_custom_call.1} parent=35 // pred_check_branch
          %270 = sbr.rel (%p268) target = $region40
        $region39: #{tpu_custom_call.1} parent=35 // pred_region
          %s271 = smul.u32 2, %s22
          %p272 = scmp.lt.s32.totalorder %s271, 3
          %s273 = scalar_select %p272, %s271, 3
          %s274 = smul.addr %s273, 8
          %s275 = scalar_lea.vmem %s0, %s274
          %s276 = smul.u32 2, %s22
        $region40: #{tpu_custom_call.1} parent=35 // pred_fallthru
          _
      $region36: #{tpu_custom_call.1} parent=5 // pred_fallthru
        _
      %p277 = scmp.le.s32.totalorder 1, %s22
      %p278 = scmp.lt.s32.totalorder %s22, 3
      %p279 = pnand %p277, %p278
      %p280 = pneg %p279
      // Predicated region
      $region41: #{tpu_custom_call.1} parent=5 // pred_check
        _
      $region42: #{tpu_custom_call.1} parent=5 // pred_check_branch
        %282 = sbr.rel (%p279) target = $region44
      $region43: #{tpu_custom_call.1} parent=5 // pred_region
        %s283 = ssub.s32 %s22, 1
        // Predicated region
        $region45: #{tpu_custom_call.1} parent=43 // pred_check
          %p284 = pneg %p69
        $region46: #{tpu_custom_call.1} parent=43 // pred_check_branch
          %286 = sbr.rel (%p284) target = $region48
        $region47: #{tpu_custom_call.1} parent=43 // pred_region
          %288 = dma.done [#allocation4], 288
        $region48: #{tpu_custom_call.1} parent=43 // pred_fallthru
          _
        // Predicated region
        $region49: #{tpu_custom_call.1} parent=43 // pred_check
          %p289 = pneg %p111
        $region50: #{tpu_custom_call.1} parent=43 // pred_check_branch
          %291 = sbr.rel (%p289) target = $region52
        $region51: #{tpu_custom_call.1} parent=43 // pred_region
          %293 = dma.done [#allocation7], 256
        $region52: #{tpu_custom_call.1} parent=43 // pred_fallthru
          _
        // Predicated region
        $region53: #{tpu_custom_call.1} parent=43 // pred_check
          %p294 = pneg %p132
        $region54: #{tpu_custom_call.1} parent=43 // pred_check_branch
          %296 = sbr.rel (%p294) target = $region56
        $region55: #{tpu_custom_call.1} parent=43 // pred_region
          %298 = dma.done [#allocation7], 256
        $region56: #{tpu_custom_call.1} parent=43 // pred_fallthru
          _
        %s299 = smul.u32 2, %s27
        %p300 = scmp.lt.s32.totalorder %s299, 3
        %s301 = scalar_select %p300, %s299, 3
        %s302 = smul.addr %s301, 8
        %s303 = scalar_lea.vmem %s0, %s302
        %p304 = pneg %p48
        %p305 = pneg %p45
        %p306 = pneg %p69
        %p307 = pneg %p66
        %p308 = pneg %p90
        %p309 = pneg %p87
        %p310 = pneg %p111
        %p311 = pneg %p108
        %p312 = pneg %p132
        %p313 = pneg %p129
        %p314 = pneg %p153
        %p315 = pneg %p150
        %p316 = pneg %p179
        %p317 = pneg %p176
        %s318 = sand.u32 %s166, 1
        %s319 = scalar_lea.sflag [#allocation5], %s318
        %s320 = sand.u32 %s166, 1
        %s321 = smul.addr %s320, 16
        %s322 = scalar_lea.vmem [#allocation9], %s321
        %p323 = pneg %p205
        %p324 = pneg %p202
        %s325 = sand.u32 %s192, 1
        %s326 = scalar_lea.sflag [#allocation11], %s325
        %s327 = sand.u32 %s192, 1
        %s328 = smul.addr %s327, 16
        %s329 = scalar_lea.vmem [#allocation10], %s328
        %s330 = smul.u32 2, %s27
        %p331 = scmp.lt.s32.totalorder %s330, 3
        %s332 = scalar_select %p331, %s330, 3
        %s333 = smul.addr %s332, 8
        %s334 = scalar_lea.vmem %s0, %s333
        %s335 = smul.u32 2, %s27
        %s336 = smul.u32 2, %s27
        %s337 = smul.u32 2, %s27
        %v338 = vld [vmem:[%s334] sm:$0xff]
        %v339 = vld [vmem:[%s334 + $0x8] sm:$0xff]
        %v340 = vld [vmem:[%s5] sm:$0xff]
        %v341 = vld [vmem:[%s5 + $0x8] sm:$0xff]
        %v342 = vld [vmem:[%s2] sm:$0xff]
        %v343 = vld [vmem:[%s2 + $0x8] sm:$0xff]
        %345 = vset.pattern.permute.xlu0 0
        %346 = vperm.xlu0 %345, %v340
        %v347 = vpop.permute.xlu0 %346
        %350 = vset.pattern.permute.xlu0 0
        %351 = vperm.xlu0 %350, %v341
        %v352 = vpop.permute.xlu0 %351
        %vm354 = vcmask 64512
        %v356 = vsel %vm354, %v342, 0
        %v359 = vsel %vm354, %v343, 0
        %361 = vmatpush.msra.mxu0 0.0
        %362 = vmatpush.msra.mxu0 0.0
        %363 = vmatpush.msra.mxu0 0.0
        %364 = vmatpush.msra.mxu0 0.0
        %365 = vmatpush.msra.mxu0 0.0
        %366 = vmatpush.msra.mxu0 0.0
        %367 = vmatpush.msra.mxu0 0.0
        %368 = vmatpush.msra.mxu0 0.0
        %369 = vmatpush.msra.mxu0 0.0
        %370 = vmatpush.msra.mxu0 0.0
        %371 = vmatpush.msra.mxu0 0.0
        %372 = vmatpush.msra.mxu0 0.0
        %373 = vmatpush.msra.mxu0 0.0
        %374 = vmatpush.msra.mxu0 0.0
        %375 = vmatpush.msra.mxu0 0.0
        %376 = vmatpush.msra.mxu0 %v338
        %377 = vmatmul.f32.gmra.mxu0 %v356
        %v378 = vpop.f32.mrf.mxu0
        %v379 = vadd.f32 %v347, %v378
        %380 = vmatmul.f32.gmra.mxu0 %v359
        %v381 = vpop.f32.mrf.mxu0
        %v382 = vadd.f32 %v352, %v381
        %383 = vdwg.mxu0
        %384 = vmatpush.msra.mxu0 0.0
        %385 = vmatpush.msra.mxu0 0.0
        %386 = vmatpush.msra.mxu0 0.0
        %387 = vmatpush.msra.mxu0 0.0
        %388 = vmatpush.msra.mxu0 0.0
        %389 = vmatpush.msra.mxu0 0.0
        %390 = vmatpush.msra.mxu0 0.0
        %391 = vmatpush.msra.mxu0 0.0
        %392 = vmatpush.msra.mxu0 0.0
        %393 = vmatpush.msra.mxu0 0.0
        %394 = vmatpush.msra.mxu0 0.0
        %395 = vmatpush.msra.mxu0 0.0
        %396 = vmatpush.msra.mxu0 0.0
        %397 = vmatpush.msra.mxu0 0.0
        %398 = vmatpush.msra.mxu0 0.0
        %399 = vmatpush.msra.mxu0 %v339
        %400 = vmatmul.f32.gmra.mxu0 %v356
        %v401 = vpop.f32.mrf.mxu0
        %v402 = vadd.f32 %v347, %v401
        %403 = vmatmul.f32.gmra.mxu0 %v359
        %v404 = vpop.f32.mrf.mxu0
        %v405 = vadd.f32 %v352, %v404
        %406 = vdwg.mxu0
        %v407 = vmax.f32 %v379, 0.0
        %v408 = vmax.f32 %v402, 0.0
        %v409 = vmax.f32 %v382, 0.0
        %v410 = vmax.f32 %v405, 0.0
        %411 = vset.pattern.permute.xlu0 1
        %412 = vperm.xlu0 %411, %v340
        %v413 = vpop.permute.xlu0 %412
        %415 = vset.pattern.permute.xlu0 1
        %416 = vperm.xlu0 %415, %v341
        %v417 = vpop.permute.xlu0 %416
        %v419 = vmul.f32 %v338, %v413
        %v420 = vmul.f32 %v339, %v413
        %v421 = vmul.f32 %v417, 0.0
        %422 = vset.pattern.permute.xlu0 2
        %423 = vperm.xlu0 %422, %v340
        %v424 = vpop.permute.xlu0 %423
        %426 = vset.pattern.permute.xlu0 2
        %427 = vperm.xlu0 %426, %v341
        %v428 = vpop.permute.xlu0 %427
        %v430 = vadd.f32 %v419, %v424
        %v431 = vadd.f32 %v420, %v424
        %v432 = vadd.f32 %v421, %v428
        %v433 = vadd.f32 %v407, %v430
        %v434 = vadd.f32 %v408, %v431
        %v435 = vadd.f32 %v409, %v432
        %v436 = vadd.f32 %v410, %v432
        %441 = vrot.lane.b32.xlu0 %v433, 17
        %v442 = vpop.permute.xlu0 %441
        %443 = vrot.lane.b32.xlu0 %v434, 17
        %v444 = vpop.permute.xlu0 %443
        %445 = vrot.lane.b32.xlu0 %v435, 17
        %v446 = vpop.permute.xlu0 %445
        %447 = vrot.lane.b32.xlu0 %v436, 17
        %v448 = vpop.permute.xlu0 %447
        %vm449 = vcmask 138240
        %v450 = vsel %vm449, %v442, %v444
        %v451 = vsel %vm449, %v446, %v448
        %v456 = vsel %vm449, 0.0, %v442
        %v457 = vsel %vm449, 0.0, %v446
        %v458 = vld [vmem:[#allocation3] sm:$0x3]
        %v460 = vperm.slane %v458, 0
        %v461 = vperm.slane %v458, 1
        %v464 = vmul.f32 %v456, %v460
        %v465 = vmul.f32 %v450, %v461
        %v466 = vmul.f32 %v457, %v460
        %v467 = vmul.f32 %v451, %v461
        %468 = vst [vmem:[#allocation2] sm:$0xff] %v464
        %469 = vst [vmem:[#allocation2 + $0x8] sm:$0xff] %v465
        %470 = vst [vmem:[#allocation2 + $0x10] sm:$0xff] %v466
        %471 = vst [vmem:[#allocation2 + $0x18] sm:$0xff] %v467
        %472 = vrot.lane.b32.xlu0 %v433, 16
        %v473 = vpop.permute.xlu0 %472
        %474 = vrot.lane.b32.xlu0 %v434, 16
        %v475 = vpop.permute.xlu0 %474
        %476 = vrot.lane.b32.xlu0 %v435, 16
        %v477 = vpop.permute.xlu0 %476
        %478 = vrot.lane.b32.xlu0 %v436, 16
        %v479 = vpop.permute.xlu0 %478
        %vm480 = vcmask 130048
        %v481 = vsel %vm480, %v473, %v475
        %v482 = vsel %vm480, %v477, %v479
        %v487 = vsel %vm480, 0.0, %v473
        %v488 = vsel %vm480, 0.0, %v477
        %s489 = scalar_lea.vmem [#allocation3], 2
        %v490 = vld [vmem:[%s489] sm:$0x3]
        %v492 = vperm.slane %v490, 0
        %v493 = vperm.slane %v490, 1
        %v496 = vmul.f32 %v487, %v492
        %v497 = vmul.f32 %v481, %v493
        %v498 = vmul.f32 %v488, %v492
        %v499 = vmul.f32 %v482, %v493
        %500 = vst [vmem:[#allocation2 + $0x20] sm:$0xff] %v496
        %501 = vst [vmem:[#allocation2 + $0x28] sm:$0xff] %v497
        %502 = vst [vmem:[#allocation2 + $0x30] sm:$0xff] %v498
        %503 = vst [vmem:[#allocation2 + $0x38] sm:$0xff] %v499
        %504 = vrot.lane.b32.xlu0 %v433, 15
        %v505 = vpop.permute.xlu0 %504
        %506 = vrot.lane.b32.xlu0 %v434, 15
        %v507 = vpop.permute.xlu0 %506
        %508 = vrot.lane.b32.xlu0 %v435, 15
        %v509 = vpop.permute.xlu0 %508
        %510 = vrot.lane.b32.xlu0 %v436, 15
        %v511 = vpop.permute.xlu0 %510
        %vm512 = vcmask 121856
        %v513 = vsel %vm512, %v505, %v507
        %v514 = vsel %vm512, %v509, %v511
        %v519 = vsel %vm512, 0.0, %v505
        %v520 = vsel %vm512, 0.0, %v509
        %s521 = scalar_lea.vmem [#allocation3], 4
        %v522 = vld [vmem:[%s521] sm:$0x3]
        %v524 = vperm.slane %v522, 0
        %v525 = vperm.slane %v522, 1
        %v528 = vmul.f32 %v519, %v524
        %v529 = vmul.f32 %v513, %v525
        %v530 = vmul.f32 %v520, %v524
        %v531 = vmul.f32 %v514, %v525
        %532 = vst [vmem:[#allocation2 + $0x40] sm:$0xff] %v528
        %533 = vst [vmem:[#allocation2 + $0x48] sm:$0xff] %v529
        %534 = vst [vmem:[#allocation2 + $0x50] sm:$0xff] %v530
        %535 = vst [vmem:[#allocation2 + $0x58] sm:$0xff] %v531
        %536 = vrot.lane.b32.xlu0 %v433, 1
        %v537 = vpop.permute.xlu0 %536
        %538 = vrot.lane.b32.xlu0 %v434, 1
        %v539 = vpop.permute.xlu0 %538
        %540 = vrot.lane.b32.xlu0 %v435, 1
        %v541 = vpop.permute.xlu0 %540
        %542 = vrot.lane.b32.xlu0 %v436, 1
        %v543 = vpop.permute.xlu0 %542
        %vm544 = vcmask 7168
        %v545 = vsel %vm544, %v537, %v539
        %v546 = vsel %vm544, %v541, %v543
        %v551 = vsel %vm544, 0.0, %v537
        %v552 = vsel %vm544, 0.0, %v541
        %s553 = scalar_lea.vmem [#allocation3], 6
        %v554 = vld [vmem:[%s553] sm:$0x3]
        %v556 = vperm.slane %v554, 0
        %v557 = vperm.slane %v554, 1
        %v560 = vmul.f32 %v551, %v556
        %v561 = vmul.f32 %v545, %v557
        %v562 = vmul.f32 %v552, %v556
        %v563 = vmul.f32 %v546, %v557
        %564 = vst [vmem:[#allocation2 + $0x60] sm:$0xff] %v560
        %565 = vst [vmem:[#allocation2 + $0x68] sm:$0xff] %v561
        %566 = vst [vmem:[#allocation2 + $0x70] sm:$0xff] %v562
        %567 = vst [vmem:[#allocation2 + $0x78] sm:$0xff] %v563
        %s568 = scalar_lea.vmem [#allocation3], 8
        %v569 = vld [vmem:[%s568] sm:$0x3]
        %v571 = vperm.slane %v569, 0
        %v572 = vperm.slane %v569, 1
        %v575 = vmul.f32 %v433, %v571
        %v576 = vmul.f32 %v434, %v572
        %v577 = vmul.f32 %v435, %v571
        %v578 = vmul.f32 %v436, %v572
        %579 = vst [vmem:[#allocation2 + $0x80] sm:$0xff] %v575
        %580 = vst [vmem:[#allocation2 + $0x88] sm:$0xff] %v576
        %581 = vst [vmem:[#allocation2 + $0x90] sm:$0xff] %v577
        %582 = vst [vmem:[#allocation2 + $0x98] sm:$0xff] %v578
        %583 = vrot.lane.b32.xlu0 %v433, 127
        %v584 = vpop.permute.xlu0 %583
        %585 = vrot.lane.b32.xlu0 %v434, 127
        %v586 = vpop.permute.xlu0 %585
        %587 = vrot.lane.b32.xlu0 %v435, 127
        %v588 = vpop.permute.xlu0 %587
        %589 = vrot.lane.b32.xlu0 %v436, 127
        %v590 = vpop.permute.xlu0 %589
        %vm591 = vcmask 1039360
        %v592 = vsel %vm591, %v584, %v586
        %v593 = vsel %vm591, %v588, %v590
        %v598 = vsel %vm591, %v586, 0.0
        %v599 = vsel %vm591, %v590, 0.0
        %s600 = scalar_lea.vmem [#allocation3], 10
        %v601 = vld [vmem:[%s600] sm:$0x3]
        %v603 = vperm.slane %v601, 0
        %v604 = vperm.slane %v601, 1
        %v607 = vmul.f32 %v592, %v603
        %v608 = vmul.f32 %v598, %v604
        %v609 = vmul.f32 %v593, %v603
        %v610 = vmul.f32 %v599, %v604
        %611 = vst [vmem:[#allocation2 + $0xa0] sm:$0xff] %v607
        %612 = vst [vmem:[#allocation2 + $0xa8] sm:$0xff] %v608
        %613 = vst [vmem:[#allocation2 + $0xb0] sm:$0xff] %v609
        %614 = vst [vmem:[#allocation2 + $0xb8] sm:$0xff] %v610
        %615 = vrot.lane.b32.xlu0 %v433, 113
        %v616 = vpop.permute.xlu0 %615
        %617 = vrot.lane.b32.xlu0 %v434, 113
        %v618 = vpop.permute.xlu0 %617
        %619 = vrot.lane.b32.xlu0 %v435, 113
        %v620 = vpop.permute.xlu0 %619
        %621 = vrot.lane.b32.xlu0 %v436, 113
        %v622 = vpop.permute.xlu0 %621
        %vm623 = vcmask 924672
        %v624 = vsel %vm623, %v616, %v618
        %v625 = vsel %vm623, %v620, %v622
        %v630 = vsel %vm623, %v618, 0.0
        %v631 = vsel %vm623, %v622, 0.0
        %s632 = scalar_lea.vmem [#allocation3], 12
        %v633 = vld [vmem:[%s632] sm:$0x3]
        %v635 = vperm.slane %v633, 0
        %v636 = vperm.slane %v633, 1
        %v639 = vmul.f32 %v624, %v635
        %v640 = vmul.f32 %v630, %v636
        %v641 = vmul.f32 %v625, %v635
        %v642 = vmul.f32 %v631, %v636
        %643 = vst [vmem:[#allocation2 + $0xc0] sm:$0xff] %v639
        %644 = vst [vmem:[#allocation2 + $0xc8] sm:$0xff] %v640
        %645 = vst [vmem:[#allocation2 + $0xd0] sm:$0xff] %v641
        %646 = vst [vmem:[#allocation2 + $0xd8] sm:$0xff] %v642
        %647 = vrot.lane.b32.xlu0 %v433, 112
        %v648 = vpop.permute.xlu0 %647
        %649 = vrot.lane.b32.xlu0 %v434, 112
        %v650 = vpop.permute.xlu0 %649
        %651 = vrot.lane.b32.xlu0 %v435, 112
        %v652 = vpop.permute.xlu0 %651
        %653 = vrot.lane.b32.xlu0 %v436, 112
        %v654 = vpop.permute.xlu0 %653
        %vm655 = vcmask 916480
        %v656 = vsel %vm655, %v648, %v650
        %v657 = vsel %vm655, %v652, %v654
        %v662 = vsel %vm655, %v650, 0.0
        %v663 = vsel %vm655, %v654, 0.0
        %s664 = scalar_lea.vmem [#allocation3], 14
        %v665 = vld [vmem:[%s664] sm:$0x3]
        %v667 = vperm.slane %v665, 0
        %v668 = vperm.slane %v665, 1
        %v671 = vmul.f32 %v656, %v667
        %v672 = vmul.f32 %v662, %v668
        %v673 = vmul.f32 %v657, %v667
        %v674 = vmul.f32 %v663, %v668
        %675 = vst [vmem:[#allocation2 + $0xe0] sm:$0xff] %v671
        %676 = vst [vmem:[#allocation2 + $0xe8] sm:$0xff] %v672
        %677 = vst [vmem:[#allocation2 + $0xf0] sm:$0xff] %v673
        %678 = vst [vmem:[#allocation2 + $0xf8] sm:$0xff] %v674
        %679 = vrot.lane.b32.xlu0 %v433, 111
        %v680 = vpop.permute.xlu0 %679
        %681 = vrot.lane.b32.xlu0 %v434, 111
        %v682 = vpop.permute.xlu0 %681
        %683 = vrot.lane.b32.xlu0 %v435, 111
        %v684 = vpop.permute.xlu0 %683
        %685 = vrot.lane.b32.xlu0 %v436, 111
        %v686 = vpop.permute.xlu0 %685
        %vm687 = vcmask 908288
        %v688 = vsel %vm687, %v680, %v682
        %v689 = vsel %vm687, %v684, %v686
        %v694 = vsel %vm687, %v682, 0.0
        %v695 = vsel %vm687, %v686, 0.0
        %s696 = scalar_lea.vmem [#allocation3], 16
        %v697 = vld [vmem:[%s696] sm:$0x3]
        %v699 = vperm.slane %v697, 0
        %v700 = vperm.slane %v697, 1
        %v703 = vmul.f32 %v688, %v699
        %v704 = vmul.f32 %v694, %v700
        %v705 = vmul.f32 %v689, %v699
        %v706 = vmul.f32 %v695, %v700
        %707 = vst [vmem:[#allocation2 + $0x100] sm:$0xff] %v703
        %708 = vst [vmem:[#allocation2 + $0x108] sm:$0xff] %v704
        %709 = vst [vmem:[#allocation2 + $0x110] sm:$0xff] %v705
        %710 = vst [vmem:[#allocation2 + $0x118] sm:$0xff] %v706
        %v711 = vld [vmem:[#allocation6] sm:$0xff]
        %v712 = vld [vmem:[#allocation6 + $0x8] sm:$0xff]
        %v713 = vld [vmem:[#allocation2] sm:$0xff]
        %v714 = vld [vmem:[#allocation2 + $0x8] sm:$0xff]
        %v715 = vld [vmem:[#allocation2 + $0x10] sm:$0xff]
        %v716 = vld [vmem:[#allocation2 + $0x18] sm:$0xff]
        %v717 = vld [vmem:[#allocation2 + $0x20] sm:$0xff]
        %v718 = vld [vmem:[#allocation2 + $0x28] sm:$0xff]
        %v719 = vld [vmem:[#allocation2 + $0x30] sm:$0xff]
        %v720 = vld [vmem:[#allocation2 + $0x38] sm:$0xff]
        %v721 = vld [vmem:[#allocation2 + $0x40] sm:$0xff]
        %v722 = vld [vmem:[#allocation2 + $0x48] sm:$0xff]
        %v723 = vld [vmem:[#allocation2 + $0x50] sm:$0xff]
        %v724 = vld [vmem:[#allocation2 + $0x58] sm:$0xff]
        %v725 = vld [vmem:[#allocation2 + $0x60] sm:$0xff]
        %v726 = vld [vmem:[#allocation2 + $0x68] sm:$0xff]
        %v727 = vld [vmem:[#allocation2 + $0x70] sm:$0xff]
        %v728 = vld [vmem:[#allocation2 + $0x78] sm:$0xff]
        %v729 = vld [vmem:[#allocation2 + $0x80] sm:$0xff]
        %v730 = vld [vmem:[#allocation2 + $0x88] sm:$0xff]
        %v731 = vld [vmem:[#allocation2 + $0x90] sm:$0xff]
        %v732 = vld [vmem:[#allocation2 + $0x98] sm:$0xff]
        %v733 = vld [vmem:[#allocation2 + $0xa0] sm:$0xff]
        %v734 = vld [vmem:[#allocation2 + $0xa8] sm:$0xff]
        %v735 = vld [vmem:[#allocation2 + $0xb0] sm:$0xff]
        %v736 = vld [vmem:[#allocation2 + $0xb8] sm:$0xff]
        %v737 = vld [vmem:[#allocation2 + $0xc0] sm:$0xff]
        %v738 = vld [vmem:[#allocation2 + $0xc8] sm:$0xff]
        %v739 = vld [vmem:[#allocation2 + $0xd0] sm:$0xff]
        %v740 = vld [vmem:[#allocation2 + $0xd8] sm:$0xff]
        %v741 = vld [vmem:[#allocation2 + $0xe0] sm:$0xff]
        %v742 = vld [vmem:[#allocation2 + $0xe8] sm:$0xff]
        %v743 = vld [vmem:[#allocation2 + $0xf0] sm:$0xff]
        %v744 = vld [vmem:[#allocation2 + $0xf8] sm:$0xff]
        %v745 = vld [vmem:[#allocation2 + $0x100] sm:$0xff]
        %v746 = vld [vmem:[#allocation2 + $0x108] sm:$0xff]
        %v747 = vld [vmem:[#allocation2 + $0x110] sm:$0xff]
        %v748 = vld [vmem:[#allocation2 + $0x118] sm:$0xff]
        %v749 = vld [vmem:[#allocation8] sm:$0xff]
        %v750 = vld [vmem:[#allocation8 + $0x8] sm:$0xff]
        %v752 = vsel %vm480, %v712, 0
        %754 = vmatpush.msra.mxu0 %v743
        %755 = vmatpush.msra.mxu0 %v741
        %756 = vmatpush.msra.mxu0 %v739
        %757 = vmatpush.msra.mxu0 %v737
        %758 = vmatpush.msra.mxu0 %v735
        %759 = vmatpush.msra.mxu0 %v733
        %760 = vmatpush.msra.mxu0 %v731
        %761 = vmatpush.msra.mxu0 %v729
        %762 = vmatpush.msra.mxu0 %v727
        %763 = vmatpush.msra.mxu0 %v725
        %764 = vmatpush.msra.mxu0 %v723
        %765 = vmatpush.msra.mxu0 %v721
        %766 = vmatpush.msra.mxu0 %v719
        %767 = vmatpush.msra.mxu0 %v717
        %768 = vmatpush.msra.mxu0 %v715
        %769 = vmatpush.msra.mxu0 %v713
        %770 = vmatmul.f32.gmra.mxu0 %v711
        %v771 = vpop.f32.mrf.mxu0
        %v772 = vadd.f32 %v749, %v771
        %773 = vdwg.mxu0
        %774 = vmatpush.msra.mxu0 0.0
        %775 = vmatpush.msra.mxu0 0.0
        %776 = vmatpush.msra.mxu0 0.0
        %777 = vmatpush.msra.mxu0 0.0
        %778 = vmatpush.msra.mxu0 0.0
        %779 = vmatpush.msra.mxu0 0.0
        %780 = vmatpush.msra.mxu0 0.0
        %781 = vmatpush.msra.mxu0 0.0
        %782 = vmatpush.msra.mxu0 0.0
        %783 = vmatpush.msra.mxu0 0.0
        %784 = vmatpush.msra.mxu0 0.0
        %785 = vmatpush.msra.mxu0 0.0
        %786 = vmatpush.msra.mxu0 0.0
        %787 = vmatpush.msra.mxu0 0.0
        %788 = vmatpush.msra.mxu0 %v747
        %789 = vmatpush.msra.mxu0 %v745
        %790 = vmatmul.f32.gmra.mxu0 %v752
        %v791 = vpop.f32.mrf.mxu0
        %v792 = vadd.f32 %v772, %v791
        %793 = vdwg.mxu0
        %794 = vmatpush.msra.mxu0 %v744
        %795 = vmatpush.msra.mxu0 %v742
        %796 = vmatpush.msra.mxu0 %v740
        %797 = vmatpush.msra.mxu0 %v738
        %798 = vmatpush.msra.mxu0 %v736
        %799 = vmatpush.msra.mxu0 %v734
        %800 = vmatpush.msra.mxu0 %v732
        %801 = vmatpush.msra.mxu0 %v730
        %802 = vmatpush.msra.mxu0 %v728
        %803 = vmatpush.msra.mxu0 %v726
        %804 = vmatpush.msra.mxu0 %v724
        %805 = vmatpush.msra.mxu0 %v722
        %806 = vmatpush.msra.mxu0 %v720
        %807 = vmatpush.msra.mxu0 %v718
        %808 = vmatpush.msra.mxu0 %v716
        %809 = vmatpush.msra.mxu0 %v714
        %810 = vmatmul.f32.gmra.mxu0 %v711
        %v811 = vpop.f32.mrf.mxu0
        %v812 = vadd.f32 %v750, %v811
        %813 = vdwg.mxu0
        %814 = vmatpush.msra.mxu0 0.0
        %815 = vmatpush.msra.mxu0 0.0
        %816 = vmatpush.msra.mxu0 0.0
        %817 = vmatpush.msra.mxu0 0.0
        %818 = vmatpush.msra.mxu0 0.0
        %819 = vmatpush.msra.mxu0 0.0
        %820 = vmatpush.msra.mxu0 0.0
        %821 = vmatpush.msra.mxu0 0.0
        %822 = vmatpush.msra.mxu0 0.0
        %823 = vmatpush.msra.mxu0 0.0
        %824 = vmatpush.msra.mxu0 0.0
        %825 = vmatpush.msra.mxu0 0.0
        %826 = vmatpush.msra.mxu0 0.0
        %827 = vmatpush.msra.mxu0 0.0
        %828 = vmatpush.msra.mxu0 %v748
        %829 = vmatpush.msra.mxu0 %v746
        %830 = vmatmul.f32.gmra.mxu0 %v752
        %v831 = vpop.f32.mrf.mxu0
        %v832 = vadd.f32 %v812, %v831
        %833 = vdwg.mxu0
        %v834 = vmax.f32 %v792, 0.0
        %v835 = vmax.f32 %v832, 0.0
        %v836 = vadd.f32 %v433, %v435
        %v837 = vadd.f32 %v434, %v436
        %838 = vset.pattern.permute.xlu0 3
        %839 = vperm.xlu0 %838, %v340
        %v840 = vpop.permute.xlu0 %839
        %v842 = vmul.f32 %v836, %v840
        %v843 = vmul.f32 %v837, %v840
        %844 = vset.pattern.permute.xlu0 4
        %845 = vperm.xlu0 %844, %v340
        %v846 = vpop.permute.xlu0 %845
        %v848 = vadd.f32 %v842, %v846
        %v849 = vadd.f32 %v843, %v846
        %850 = vst [vmem:[%s322] sm:$0xff] %v834
        %851 = vst [vmem:[%s322 + $0x8] sm:$0xff] %v835
        %852 = vst [vmem:[%s329] sm:$0xff] %v848
        %853 = vst [vmem:[%s329 + $0x8] sm:$0xff] %v849
        %s854 = sand.u32 %s166, 1
        %s855 = scalar_lea.sflag [#allocation5], %s854
        %s856 = sand.u32 %s166, 1
        %s857 = smul.addr %s856, 16
        %s858 = scalar_lea.vmem [#allocation9], %s857
        %s859 = sand.u32 %s192, 1
        %s860 = scalar_lea.sflag [#allocation11], %s859
        %s861 = sand.u32 %s192, 1
        %s862 = smul.addr %s861, 16
        %s863 = scalar_lea.vmem [#allocation10], %s862
        // Predicated region
        $region57: #{tpu_custom_call.1} parent=43 // pred_check
          %p864 = pneg %p176
        $region58: #{tpu_custom_call.1} parent=43 // pred_check_branch
          %866 = sbr.rel (%p864) target = $region60
        $region59: #{tpu_custom_call.1} parent=43 // pred_region
          %s867 = smul.u32 2, %s27
          %869 = vsyncadd %s855, 0
          %s870 = smul.addr %s867, 8
          %s871 = scalar_lea.hbm %s6, %s870
          %s873 = sshll.u32 %s858, 4
          %s874 = int_to_ptr.vmem [resolvable:$true] %s873
          %s875 = sshll.u32 %s871, 4
          %s876 = int_to_ptr.hbm [resolvable:$true] %s875
          %878 = dma.vmem_to_hbm [thread:$0]  %s874, 256, %s876, %s855
        $region60: #{tpu_custom_call.1} parent=43 // pred_fallthru
          _
        // Predicated region
        $region61: #{tpu_custom_call.1} parent=43 // pred_check
          %p879 = pneg %p202
        $region62: #{tpu_custom_call.1} parent=43 // pred_check_branch
          %881 = sbr.rel (%p879) target = $region64
        $region63: #{tpu_custom_call.1} parent=43 // pred_region
          %s882 = smul.u32 2, %s27
          %884 = vsyncadd %s860, 0
          %s885 = smul.addr %s882, 8
          %s886 = scalar_lea.hbm %s7, %s885
          %s888 = sshll.u32 %s863, 4
          %s889 = int_to_ptr.vmem [resolvable:$true] %s888
          %s890 = sshll.u32 %s886, 4
          %s891 = int_to_ptr.hbm [resolvable:$true] %s890
          %893 = dma.vmem_to_hbm [thread:$0]  %s889, 256, %s891, %s860
        $region64: #{tpu_custom_call.1} parent=43 // pred_fallthru
          _
      $region44: #{tpu_custom_call.1} parent=5 // pred_fallthru
        _
      %p894 = scmp.le.s32.totalorder 2, %s22
      // Predicated region
      $region65: #{tpu_custom_call.1} parent=5 // pred_check
        %p895 = pneg %p894
      $region66: #{tpu_custom_call.1} parent=5 // pred_check_branch
        %897 = sbr.rel (%p895) target = $region68
      $region67: #{tpu_custom_call.1} parent=5 // pred_region
        %s898 = ssub.s32 %s22, 2
        // Predicated region
        $region69: #{tpu_custom_call.1} parent=67 // pred_check
          %p899 = pneg %p182
        $region70: #{tpu_custom_call.1} parent=67 // pred_check_branch
          %901 = sbr.rel (%p899) target = $region72
        $region71: #{tpu_custom_call.1} parent=67 // pred_region
          %s902 = sand.u32 %s167, 1
          %s903 = scalar_lea.sflag [#allocation5], %s902
          %s904 = sand.u32 %s167, 1
          %s905 = smul.addr %s904, 16
          %s906 = scalar_lea.vmem [#allocation9], %s905
          %908 = dma.done %s903, 256
        $region72: #{tpu_custom_call.1} parent=67 // pred_fallthru
          _
        // Predicated region
        $region73: #{tpu_custom_call.1} parent=67 // pred_check
          %p909 = pneg %p208
        $region74: #{tpu_custom_call.1} parent=67 // pred_check_branch
          %911 = sbr.rel (%p909) target = $region76
        $region75: #{tpu_custom_call.1} parent=67 // pred_region
          %s912 = sand.u32 %s193, 1
          %s913 = scalar_lea.sflag [#allocation11], %s912
          %s914 = sand.u32 %s193, 1
          %s915 = smul.addr %s914, 16
          %s916 = scalar_lea.vmem [#allocation10], %s915
          %918 = dma.done %s913, 256
        $region76: #{tpu_custom_call.1} parent=67 // pred_fallthru
          _
      $region68: #{tpu_custom_call.1} parent=5 // pred_fallthru
        _
    $region6: #{tpu_custom_call.1} parent=1 // loop_footer
      %s26 = sadd.s32 1, %s22
    $region7: #{tpu_custom_call.1} parent=1 // loop_footer_branch
      %21 = sbr.rel target = $region3
    $region8: #{tpu_custom_call.1} parent=1 // loop_exit
      _
    %919 = vsyncpa [#allocation4], 1
    %s920 = scalar_lea.sflag [#allocation4], 1
    %921 = vsyncpa %s920, 1
    %922 = vsyncpa [#allocation7], 1
    %923 = vsyncpa [#allocation5], 1
    %s924 = scalar_lea.sflag [#allocation5], 1
    %925 = vsyncpa %s924, 1
    %926 = vsyncpa [#allocation11], 1
    %s927 = scalar_lea.sflag [#allocation11], 1
    %928 = vsyncpa %s927, 1

</llo_original>
